<compile_context>
chip_gen: v7x
topology: tpu7x:2x2x1
jax: 0.10.0
libtpu: 0.0.40
codegen_flags: <defaults>
</compile_context>

<pallas_src>
import numpy as np
import jax
import jax.numpy as jnp
from jax import lax
from jax.experimental import pallas as pl
from jax.experimental.pallas import tpu as pltpu

# ----------------------- encoding config (Module_pbc.__init__) ---------------
N_LEVELS = 4
N_FEATURES = 2
BASE_RES = 8
PER_LEVEL_SCALE = 1.5
BC_SIDE = 1.0                 # stored by the torch module; unused in forward
N_INPUT_DIMS = 2
N_OUTPUT_DIMS = N_LEVELS * N_FEATURES
BATCH_GRANULARITY = 128       # tcnn batch_size_granularity
SEED = 1337

# per-level derived constants (same arithmetic as Module_pbc.__init__)
_scale = np.floor(
    np.power(PER_LEVEL_SCALE, np.arange(N_LEVELS, dtype="d"), dtype="d") * BASE_RES - 1
)
MAX_POS_LIST = _scale.astype(int)                       # res - 1   -> [7,11,17,26]
RES_LIST = _scale.astype(int) + 1                       #           -> [8,12,18,27]
LEVEL_TABLE_SIZE = (np.ceil(RES_LIST ** 2 / 8) * 8 * N_FEATURES).astype(int)
LEVEL_START_IDX = np.add.accumulate(
    np.concatenate([np.array([0]), LEVEL_TABLE_SIZE[:-1]])
)
N_PARAMS = int(LEVEL_TABLE_SIZE.sum())

# common padded 1-D resolution (max res = 27 -> 32); shared by every level so
# a single iota / a single stacked grid table can be reused in the kernel.
RPAD = 32
G1_ROWS = N_LEVELS * N_FEATURES * RPAD                  # 256


def _boundary_indices():
    """Exactly the index construction from Module_pbc.__init__."""
    left_idx, right_idx, bottom_idx, top_idx = [], [], [], []
    for max_pos, res, start_idx in zip(MAX_POS_LIST, RES_LIST, LEVEL_START_IDX):
        all_pos = np.arange(max_pos + 1)
        level_sets = [all_pos * res,                # left
                      max_pos + all_pos * res,      # right
                      all_pos,                      # bottom
                      all_pos + max_pos * res]      # top
        for level_idx, grid_idx in zip(level_sets,
                                       [left_idx, right_idx, bottom_idx, top_idx]):
            idx = level_idx * N_FEATURES
            idx = start_idx + np.concatenate([idx + j for j in range(N_FEATURES)])
            grid_idx.append(idx)
    left = np.concatenate(left_idx)
    right = np.concatenate(right_idx)
    bottom = np.concatenate(bottom_idx)
    top = np.concatenate(top_idx)
    inner = np.delete(np.arange(N_PARAMS),
                      np.concatenate([left, right, bottom, top]))
    return left, right, bottom, top, inner


# ----------------------------- Pallas kernel ---------------------------------
def _pbc_encoding_kernel(xt_ref, g1_ref, out_ref):
    # xt_ref : [2, T]              float32  (row 0 = u, row 1 = v; batch on lanes)
    # g1_ref : [L*F*32, 32]        bfloat16 (repacked grid: row = l*64+f*32+iy, col = ix)
    # out_ref: [L*F, T]            float32
    T = xt_ref.shape[1]
    u = jnp.clip(xt_ref[0:1, :], 0.0, 1.0)    # [1, T]
    v = jnp.clip(xt_ref[1:2, :], 0.0, 1.0)    # [1, T]

    # shared 1-D grid-coordinate column, reused by every level / both axes
    idx = lax.broadcasted_iota(jnp.int32, (RPAD, 1), 0).astype(jnp.float32)  # [32, 1]

    p_parts = []
    for l in range(N_LEVELS):
        mp = float(MAX_POS_LIST[l])
        pu = u * mp                                            # [1, T]
        pv = v * mp                                            # [1, T]

        # separable hat (bilinear) factors; rows with ix/iy >= res are exactly 0
        # because pu, pv <= res - 1.
        wu = jnp.maximum(1.0 - jnp.abs(pu - idx), 0.0).astype(jnp.bfloat16)  # [32, T]
        wv = jnp.maximum(1.0 - jnp.abs(pv - idx), 0.0)                       # [32, T] f32

        # contract over ix on the MXU:  h[f*32+iy, t] = sum_ix g1 * wu
        g1 = g1_ref[l * N_FEATURES * RPAD:(l + 1) * N_FEATURES * RPAD, :]    # [64, 32]
        h = jnp.dot(g1, wu, preferred_element_type=jnp.float32)              # [64, T]

        # apply the v-direction factor (broadcast over the two feature blocks)
        p_parts.append(h * jnp.concatenate([wv, wv], axis=0))                # [64, T]

    # reduce over iy for all levels / features at once; single full-lane store.
    p_all = jnp.concatenate(p_parts, axis=0)                                 # [256, T]
    out_ref[...] = p_all.reshape(N_OUTPUT_DIMS, RPAD, T).sum(axis=1)         # [8, T]


def pbc_encoding_forward(x, g1, *, max_tile=1024):
    """x: [B, 2] float, g1: [L*F*32, 32] bf16 -> [B, L*F] float32."""
    B = x.shape[0]
    B_pad = ((B + BATCH_GRANULARITY - 1) // BATCH_GRANULARITY) * BATCH_GRANULARITY

    # batch tile on the lane axis; prefer >= 2 grid steps (megacore) when possible
    candidates = [t for t in range(128, min(max_tile, B_pad) + 1, 128)
                  if B_pad % t == 0]
    multi = [t for t in candidates if B_pad // t >= 2]
    tile = max(multi) if multi else max(candidates)

    xt = jnp.zeros((N_INPUT_DIMS, B_pad), jnp.float32)
    xt = xt.at[:, :B].set(x.astype(jnp.float32).T)

    out_t = pl.pallas_call(
        _pbc_encoding_kernel,
        out_shape=jax.ShapeDtypeStruct((N_OUTPUT_DIMS, B_pad), jnp.float32),
        grid=(B_pad // tile,),
        in_specs=[
            pl.BlockSpec((N_INPUT_DIMS, tile), lambda i: (0, i)),
            pl.BlockSpec((G1_ROWS, RPAD), lambda i: (0, 0)),   # VMEM-resident table
        ],
        out_specs=pl.BlockSpec((N_OUTPUT_DIMS, tile), lambda i: (0, i)),
        compiler_params=pltpu.CompilerParams(
            dimension_semantics=("parallel",),
            vmem_limit_bytes=64 * 1024 * 1024),
    )(xt, g1)

    return out_t.T[:B, :N_OUTPUT_DIMS]


# ------------------------------ plain-JAX glue --------------------------------
def assemble_params(initial_params, params_inner, params_top, params_bottom,
                    params_left, params_right, idxs):
    """Module_pbc.forward parameter re-assembly (periodic BC: top <- bottom)."""
    left, right, bottom, top, inner = idxs
    p = initial_params
    p = p.at[inner].set(params_inner)
    p = p.at[top].set(params_bottom)      # top row tied to bottom params
    p = p.at[bottom].set(params_bottom)
    p = p.at[right].set(params_right)
    p = p.at[left].set(params_left)
    return p


def params_to_stage1(params_flat):
    """Flat tcnn parameter vector -> repacked table [L*F*32, 32] bf16.

    Row l*F*32 + f*32 + iy, column ix holds grid value of entry e = ix + iy*res
    for feature f of level l; unused rows/columns are zero.
    """
    g1 = jnp.zeros((G1_ROWS, RPAD), jnp.float32)
    for l in range(N_LEVELS):
        start = int(LEVEL_START_IDX[l])
        r = int(RES_LIST[l])
        seg = params_flat[start:start + r * r * N_FEATURES]
        grid = seg.reshape(r, r, N_FEATURES)           # [iy, ix, f]
        gf = jnp.transpose(grid, (2, 0, 1))            # [f, iy, ix]
        base = l * N_FEATURES * RPAD
        for f in range(N_FEATURES):
            g1 = g1.at[base + f * RPAD: base + f * RPAD + r, :r].set(gf[f])
    return g1.astype(jnp.bfloat16)


def np_reference(x, params_flat):
    """Pure numpy reference of the encoding forward (f32, clip+floor form)."""
    B = x.shape[0]
    out = np.zeros((B, N_OUTPUT_DIMS), np.float32)
    u = np.clip(x[:, 0], 0.0, 1.0)
    v = np.clip(x[:, 1], 0.0, 1.0)
    for l in range(N_LEVELS):
        res = int(RES_LIST[l])
        mp = float(MAX_POS_LIST[l])
        start = int(LEVEL_START_IDX[l])
        n_entries = res * res
        g = params_flat[start:start + n_entries * N_FEATURES].reshape(
            n_entries, N_FEATURES)
        pu = u * mp
        pv = v * mp
        iu0 = np.clip(np.floor(pu), 0.0, mp - 1.0)
        iv0 = np.clip(np.floor(pv), 0.0, mp - 1.0)
        fu = pu - iu0
        fv = pv - iv0
        iu0 = iu0.astype(int)
        iv0 = iv0.astype(int)
        acc = np.zeros((B, N_FEATURES), np.float32)
        for cu in (0, 1):
            wu = (1.0 - fu) if cu == 0 else fu
            for cv in (0, 1):
                wv = (1.0 - fv) if cv == 0 else fv
                e = (iu0 + cu) + (iv0 + cv) * res
                acc += (wu * wv)[:, None] * g[e]
        out[:, l * N_FEATURES:(l + 1) * N_FEATURES] = acc
    return out


if __name__ == "__main__":
    # deterministic inputs & parameters
    x = jax.random.uniform(jax.random.PRNGKey(0), (100, N_INPUT_DIMS),
                           dtype=jnp.float32)
    initial_params = jax.random.uniform(
        jax.random.PRNGKey(SEED), (N_PARAMS,),
        minval=-1e-4, maxval=1e-4, dtype=jnp.float32)

    idxs = _boundary_indices()
    left, right, bottom, top, inner = idxs
    # the nn.Parameter groups from Module_pbc.__init__
    params_top = initial_params[top]
    params_bottom = initial_params[bottom]
    params_left = initial_params[left]
    params_right = initial_params[right]
    params_inner = initial_params[inner]

    my_params = assemble_params(initial_params, params_inner, params_top,
                                params_bottom, params_left, params_right, idxs)
    g1 = params_to_stage1(my_params)

    out = pbc_encoding_forward(x, g1)
    out = jax.block_until_ready(out)

    assert out.shape == (100, N_OUTPUT_DIMS), out.shape
    ref = np_reference(np.asarray(x), np.asarray(my_params))
    max_err = np.max(np.abs(np.asarray(out) - ref))
    assert np.allclose(np.asarray(out), ref, atol=1e-5, rtol=1e-4), max_err
    print("KERNEL_OK")
</pallas_src>

<mosaic_0001>
module attributes {stable_mosaic.version = 11 : i64} {
  func.func @_pbc_encoding_kernel(%arg0: i32, %arg1: memref<2x128xf32, #tpu.memory_space<vmem>>, %arg2: memref<256x32xbf16, #tpu.memory_space<vmem>>, %arg3: memref<8x128xf32, #tpu.memory_space<vmem>>) attributes {dimension_semantics = [#tpu.dimension_semantics<parallel>], iteration_bounds = array<i64: 1>, scalar_prefetch = 0 : i64, scratch_operands = 0 : i64, tpu.core_type = #tpu.core_type<tc>, window_params = [{transform_indices = @transform_0, window_bounds = array<i64: 2, 128>}, {pipeline_mode = #tpu.pipeline_mode<synchronous>, transform_indices = @transform_1, window_bounds = array<i64: 256, 32>}, {transform_indices = @transform_2, window_bounds = array<i64: 8, 128>}]} {
    %c0 = arith.constant 0 : index
    %c0_0 = arith.constant 0 : index
    %0 = vector.load %arg1[%c0, %c0_0] : memref<2x128xf32, #tpu.memory_space<vmem>>, vector<1x128xf32>
    %cst = arith.constant 0.000000e+00 : f32
    %cst_1 = arith.constant 1.000000e+00 : f32
    %1 = vector.broadcast %cst : f32 to vector<1x128xf32>
    %2 = arith.maximumf %1, %0 : vector<1x128xf32>
    %3 = vector.broadcast %cst_1 : f32 to vector<1x128xf32>
    %4 = arith.minimumf %3, %2 : vector<1x128xf32>
    %c1 = arith.constant 1 : index
    %c0_2 = arith.constant 0 : index
    %5 = vector.load %arg1[%c1, %c0_2] : memref<2x128xf32, #tpu.memory_space<vmem>>, vector<1x128xf32>
    %cst_3 = arith.constant 0.000000e+00 : f32
    %cst_4 = arith.constant 1.000000e+00 : f32
    %6 = vector.broadcast %cst_3 : f32 to vector<1x128xf32>
    %7 = arith.maximumf %6, %5 : vector<1x128xf32>
    %8 = vector.broadcast %cst_4 : f32 to vector<1x128xf32>
    %9 = arith.minimumf %8, %7 : vector<1x128xf32>
    %10 = tpu.iota {dimensions = array<i32: 0>} : vector<32x1xi32>
    %11 = arith.sitofp %10 : vector<32x1xi32> to vector<32x1xf32>
    %cst_5 = arith.constant 7.000000e+00 : f32
    %12 = vector.broadcast %cst_5 : f32 to vector<1x128xf32>
    %13 = arith.mulf %4, %12 : vector<1x128xf32>
    %cst_6 = arith.constant 7.000000e+00 : f32
    %14 = vector.broadcast %cst_6 : f32 to vector<1x128xf32>
    %15 = arith.mulf %9, %14 : vector<1x128xf32>
    %16 = vector.broadcast %13 : vector<1x128xf32> to vector<32x128xf32>
    %17 = vector.broadcast %11 : vector<32x1xf32> to vector<32x128xf32>
    %18 = arith.subf %16, %17 : vector<32x128xf32>
    %19 = math.absf %18 : vector<32x128xf32>
    %cst_7 = arith.constant 1.000000e+00 : f32
    %20 = vector.broadcast %cst_7 : f32 to vector<32x128xf32>
    %21 = arith.subf %20, %19 : vector<32x128xf32>
    %cst_8 = arith.constant 0.000000e+00 : f32
    %22 = vector.broadcast %cst_8 : f32 to vector<32x128xf32>
    %23 = arith.maximumf %21, %22 : vector<32x128xf32>
    %24 = arith.truncf %23 : vector<32x128xf32> to vector<32x128xbf16>
    %25 = vector.broadcast %15 : vector<1x128xf32> to vector<32x128xf32>
    %26 = vector.broadcast %11 : vector<32x1xf32> to vector<32x128xf32>
    %27 = arith.subf %25, %26 : vector<32x128xf32>
    %28 = math.absf %27 : vector<32x128xf32>
    %cst_9 = arith.constant 1.000000e+00 : f32
    %29 = vector.broadcast %cst_9 : f32 to vector<32x128xf32>
    %30 = arith.subf %29, %28 : vector<32x128xf32>
    %cst_10 = arith.constant 0.000000e+00 : f32
    %31 = vector.broadcast %cst_10 : f32 to vector<32x128xf32>
    %32 = arith.maximumf %30, %31 : vector<32x128xf32>
    %c0_11 = arith.constant 0 : index
    %c0_12 = arith.constant 0 : index
    %33 = vector.load %arg2[%c0_11, %c0_12] : memref<256x32xbf16, #tpu.memory_space<vmem>>, vector<64x32xbf16>
    %cst_13 = arith.constant dense<0.000000e+00> : vector<64x128xf32>
    %34 = tpu.matmul %33, %24, %cst_13 {dimension_numbers = #tpu.dot_dimension_numbers<[1], [0], [0], [1], [0, 0, 1, 1], [], []>} : vector<64x32xbf16>, vector<32x128xbf16>, vector<64x128xf32> -> vector<64x128xf32>
    %35 = tpu.concatenate %32, %32 in 0 : vector<32x128xf32>, vector<32x128xf32> -> vector<64x128xf32>
    %36 = arith.mulf %34, %35 : vector<64x128xf32>
    %cst_14 = arith.constant 1.100000e+01 : f32
    %37 = vector.broadcast %cst_14 : f32 to vector<1x128xf32>
    %38 = arith.mulf %4, %37 : vector<1x128xf32>
    %cst_15 = arith.constant 1.100000e+01 : f32
    %39 = vector.broadcast %cst_15 : f32 to vector<1x128xf32>
    %40 = arith.mulf %9, %39 : vector<1x128xf32>
    %41 = vector.broadcast %38 : vector<1x128xf32> to vector<32x128xf32>
    %42 = vector.broadcast %11 : vector<32x1xf32> to vector<32x128xf32>
    %43 = arith.subf %41, %42 : vector<32x128xf32>
    %44 = math.absf %43 : vector<32x128xf32>
    %cst_16 = arith.constant 1.000000e+00 : f32
    %45 = vector.broadcast %cst_16 : f32 to vector<32x128xf32>
    %46 = arith.subf %45, %44 : vector<32x128xf32>
    %cst_17 = arith.constant 0.000000e+00 : f32
    %47 = vector.broadcast %cst_17 : f32 to vector<32x128xf32>
    %48 = arith.maximumf %46, %47 : vector<32x128xf32>
    %49 = arith.truncf %48 : vector<32x128xf32> to vector<32x128xbf16>
    %50 = vector.broadcast %40 : vector<1x128xf32> to vector<32x128xf32>
    %51 = vector.broadcast %11 : vector<32x1xf32> to vector<32x128xf32>
    %52 = arith.subf %50, %51 : vector<32x128xf32>
    %53 = math.absf %52 : vector<32x128xf32>
    %cst_18 = arith.constant 1.000000e+00 : f32
    %54 = vector.broadcast %cst_18 : f32 to vector<32x128xf32>
    %55 = arith.subf %54, %53 : vector<32x128xf32>
    %cst_19 = arith.constant 0.000000e+00 : f32
    %56 = vector.broadcast %cst_19 : f32 to vector<32x128xf32>
    %57 = arith.maximumf %55, %56 : vector<32x128xf32>
    %c64 = arith.constant 64 : index
    %c0_20 = arith.constant 0 : index
    %58 = vector.load %arg2[%c64, %c0_20] : memref<256x32xbf16, #tpu.memory_space<vmem>>, vector<64x32xbf16>
    %cst_21 = arith.constant dense<0.000000e+00> : vector<64x128xf32>
    %59 = tpu.matmul %58, %49, %cst_21 {dimension_numbers = #tpu.dot_dimension_numbers<[1], [0], [0], [1], [0, 0, 1, 1], [], []>} : vector<64x32xbf16>, vector<32x128xbf16>, vector<64x128xf32> -> vector<64x128xf32>
    %60 = tpu.concatenate %57, %57 in 0 : vector<32x128xf32>, vector<32x128xf32> -> vector<64x128xf32>
    %61 = arith.mulf %59, %60 : vector<64x128xf32>
    %cst_22 = arith.constant 1.700000e+01 : f32
    %62 = vector.broadcast %cst_22 : f32 to vector<1x128xf32>
    %63 = arith.mulf %4, %62 : vector<1x128xf32>
    %cst_23 = arith.constant 1.700000e+01 : f32
    %64 = vector.broadcast %cst_23 : f32 to vector<1x128xf32>
    %65 = arith.mulf %9, %64 : vector<1x128xf32>
    %66 = vector.broadcast %63 : vector<1x128xf32> to vector<32x128xf32>
    %67 = vector.broadcast %11 : vector<32x1xf32> to vector<32x128xf32>
    %68 = arith.subf %66, %67 : vector<32x128xf32>
    %69 = math.absf %68 : vector<32x128xf32>
    %cst_24 = arith.constant 1.000000e+00 : f32
    %70 = vector.broadcast %cst_24 : f32 to vector<32x128xf32>
    %71 = arith.subf %70, %69 : vector<32x128xf32>
    %cst_25 = arith.constant 0.000000e+00 : f32
    %72 = vector.broadcast %cst_25 : f32 to vector<32x128xf32>
    %73 = arith.maximumf %71, %72 : vector<32x128xf32>
    %74 = arith.truncf %73 : vector<32x128xf32> to vector<32x128xbf16>
    %75 = vector.broadcast %65 : vector<1x128xf32> to vector<32x128xf32>
    %76 = vector.broadcast %11 : vector<32x1xf32> to vector<32x128xf32>
    %77 = arith.subf %75, %76 : vector<32x128xf32>
    %78 = math.absf %77 : vector<32x128xf32>
    %cst_26 = arith.constant 1.000000e+00 : f32
    %79 = vector.broadcast %cst_26 : f32 to vector<32x128xf32>
    %80 = arith.subf %79, %78 : vector<32x128xf32>
    %cst_27 = arith.constant 0.000000e+00 : f32
    %81 = vector.broadcast %cst_27 : f32 to vector<32x128xf32>
    %82 = arith.maximumf %80, %81 : vector<32x128xf32>
    %c128 = arith.constant 128 : index
    %c0_28 = arith.constant 0 : index
    %83 = vector.load %arg2[%c128, %c0_28] : memref<256x32xbf16, #tpu.memory_space<vmem>>, vector<64x32xbf16>
    %cst_29 = arith.constant dense<0.000000e+00> : vector<64x128xf32>
    %84 = tpu.matmul %83, %74, %cst_29 {dimension_numbers = #tpu.dot_dimension_numbers<[1], [0], [0], [1], [0, 0, 1, 1], [], []>} : vector<64x32xbf16>, vector<32x128xbf16>, vector<64x128xf32> -> vector<64x128xf32>
    %85 = tpu.concatenate %82, %82 in 0 : vector<32x128xf32>, vector<32x128xf32> -> vector<64x128xf32>
    %86 = arith.mulf %84, %85 : vector<64x128xf32>
    %cst_30 = arith.constant 2.600000e+01 : f32
    %87 = vector.broadcast %cst_30 : f32 to vector<1x128xf32>
    %88 = arith.mulf %4, %87 : vector<1x128xf32>
    %cst_31 = arith.constant 2.600000e+01 : f32
    %89 = vector.broadcast %cst_31 : f32 to vector<1x128xf32>
    %90 = arith.mulf %9, %89 : vector<1x128xf32>
    %91 = vector.broadcast %88 : vector<1x128xf32> to vector<32x128xf32>
    %92 = vector.broadcast %11 : vector<32x1xf32> to vector<32x128xf32>
    %93 = arith.subf %91, %92 : vector<32x128xf32>
    %94 = math.absf %93 : vector<32x128xf32>
    %cst_32 = arith.constant 1.000000e+00 : f32
    %95 = vector.broadcast %cst_32 : f32 to vector<32x128xf32>
    %96 = arith.subf %95, %94 : vector<32x128xf32>
    %cst_33 = arith.constant 0.000000e+00 : f32
    %97 = vector.broadcast %cst_33 : f32 to vector<32x128xf32>
    %98 = arith.maximumf %96, %97 : vector<32x128xf32>
    %99 = arith.truncf %98 : vector<32x128xf32> to vector<32x128xbf16>
    %100 = vector.broadcast %90 : vector<1x128xf32> to vector<32x128xf32>
    %101 = vector.broadcast %11 : vector<32x1xf32> to vector<32x128xf32>
    %102 = arith.subf %100, %101 : vector<32x128xf32>
    %103 = math.absf %102 : vector<32x128xf32>
    %cst_34 = arith.constant 1.000000e+00 : f32
    %104 = vector.broadcast %cst_34 : f32 to vector<32x128xf32>
    %105 = arith.subf %104, %103 : vector<32x128xf32>
    %cst_35 = arith.constant 0.000000e+00 : f32
    %106 = vector.broadcast %cst_35 : f32 to vector<32x128xf32>
    %107 = arith.maximumf %105, %106 : vector<32x128xf32>
    %c192 = arith.constant 192 : index
    %c0_36 = arith.constant 0 : index
    %108 = vector.load %arg2[%c192, %c0_36] : memref<256x32xbf16, #tpu.memory_space<vmem>>, vector<64x32xbf16>
    %cst_37 = arith.constant dense<0.000000e+00> : vector<64x128xf32>
    %109 = tpu.matmul %108, %99, %cst_37 {dimension_numbers = #tpu.dot_dimension_numbers<[1], [0], [0], [1], [0, 0, 1, 1], [], []>} : vector<64x32xbf16>, vector<32x128xbf16>, vector<64x128xf32> -> vector<64x128xf32>
    %110 = tpu.concatenate %107, %107 in 0 : vector<32x128xf32>, vector<32x128xf32> -> vector<64x128xf32>
    %111 = arith.mulf %109, %110 : vector<64x128xf32>
    %112 = tpu.concatenate %36, %61, %86, %111 in 0 : vector<64x128xf32>, vector<64x128xf32>, vector<64x128xf32>, vector<64x128xf32> -> vector<256x128xf32>
    %113 = vector.shape_cast %112 : vector<256x128xf32> to vector<8x32x128xf32>
    %cst_38 = arith.constant dense<0.000000e+00> : vector<8x128xf32>
    %114 = vector.multi_reduction <add>, %113, %cst_38 [1] : vector<8x32x128xf32> to vector<8x128xf32>
    %c0_39 = arith.constant 0 : index
    %c0_40 = arith.constant 0 : index
    %115 = vector.load %arg3[%c0_39, %c0_40] : memref<8x128xf32, #tpu.memory_space<vmem>>, vector<8x128xf32>
    tpu.vector_store %arg3[%c0_39, %c0_40], %114 {strides = array<i32>} : memref<8x128xf32, #tpu.memory_space<vmem>>, vector<8x128xf32>,
    return
  }
  func.func @transform_0(%arg0: i32) -> (i32, i32) {
    %c0_i32 = arith.constant 0 : i32
    %c0_i32_0 = arith.constant 0 : i32
    return %c0_i32, %arg0 : i32, i32
  }
  func.func @transform_1(%arg0: i32) -> (i32, i32) {
    %c0_i32 = arith.constant 0 : i32
    %c0_i32_0 = arith.constant 0 : i32
    %c0_i32_1 = arith.constant 0 : i32
    return %c0_i32, %c0_i32_0 : i32, i32
  }
  func.func @transform_2(%arg0: i32) -> (i32, i32) {
    %c0_i32 = arith.constant 0 : i32
    %c0_i32_0 = arith.constant 0 : i32
    return %c0_i32, %arg0 : i32, i32
  }
}

</mosaic_0001>

<llo_original>
// kernel: tpu_custom_call.1
$region0: #{tpu_custom_call.1}
  #allocation0 [shape = 'u32[]', space=smem, size = 0x4, offset = 0x4, fixed_abs, tag = 'smem constant byte address 0x4 - core index']
  #allocation1 [shape = 'u32[144,128]{1,0:T(1,128)}', space=vmem, size = 0x12000, scoped, tag = 'internal scratch']
  %s0 = inlined_call_operand.hbm [shape: f32[2,128], index: 0, kind: input, shape index: {}]
  %s1 = inlined_call_operand.hbm [shape: bf16[256,32], index: 1, kind: input, shape index: {}]
  %s2 = inlined_call_operand.hbm [shape: f32[8,128], index: 2, kind: output, shape index: {}]
  %s3 = sld [smem:[#allocation0]]
  $region26: #{tpu_custom_call.1} parent=0
    _
  %s5 = ssub.s32 1, %s3
  %s6 = scalar_select 0, %s5, %s3
  $region1: #{tpu_custom_call.1} parent=0
    #allocation2 [shape = 'u8[1024]{0}', space=vmem, size = 0x400, scoped, tag = 'input window, operand 0, single buffered']
    #allocation3 [shape = 's32[1]{0}', space=sflag, size = 0x4, scoped, tag = 'scoped memory for tpu_custom_call.1']
    #allocation4 [shape = 's32[1]{0}', space=sflag, size = 0x4, scoped, tag = 'scoped memory for tpu_custom_call.1']
    #allocation5 [shape = 'u8[65536]{0}', space=vmem, size = 0x10000, scoped, tag = 'input window, operand 1, single buffered']
    #allocation6 [shape = 's32[1]{0}', space=sflag, size = 0x4, scoped, tag = 'scoped memory for tpu_custom_call.1']
    #allocation7 [shape = 'u8[4096]{0}', space=vmem, size = 0x1000, scoped, tag = 'output window, operand 0, single buffered']
    %7 = vsyncpa [#allocation3], 0
    %8 = vsyncpa [#allocation6], 0
    %9 = vsyncpa [#allocation4], 0
    // Predicated region
    $region2: #{tpu_custom_call.1} parent=1 // pred_check
      _
    $region3: #{tpu_custom_call.1} parent=1 // pred_check_branch
      %11 = sbr.rel (0) target = $region5
    $region4: #{tpu_custom_call.1} parent=1 // pred_region
      %s13 = ssub.s32 32, 32
      %14 = vsyncadd [#allocation3], %s13
      %s16 = sshll.u32 [#allocation2], 4
      %s17 = int_to_ptr.vmem [resolvable:$true] %s16
      %19 = dma.hbm_to_vmem [thread:$0]  %s0, 32, %s17, [#allocation3]
    $region5: #{tpu_custom_call.1} parent=1 // pred_fallthru
      _
    // Predicated region
    $region6: #{tpu_custom_call.1} parent=1 // pred_check
      _
    $region7: #{tpu_custom_call.1} parent=1 // pred_check_branch
      %21 = sbr.rel (0) target = $region9
    $region8: #{tpu_custom_call.1} parent=1 // pred_region
      %s23 = ssub.s32 2048, 2048
      %24 = vsyncadd [#allocation6], %s23
      %s25 = sshll.u32 [#allocation5], 4
      %s26 = int_to_ptr.vmem [resolvable:$true] %s25
      %31 = dma.hbm_to_vmem [thread:$0]  %s1, 2048, %s26, [#allocation6], 64, 64, 4
    $region9: #{tpu_custom_call.1} parent=1 // pred_fallthru
      _
    // Predicated region
    $region10: #{tpu_custom_call.1} parent=1 // pred_check
      _
    $region11: #{tpu_custom_call.1} parent=1 // pred_check_branch
      %33 = sbr.rel (0) target = $region13
    $region12: #{tpu_custom_call.1} parent=1 // pred_region
      %34 = dma.done [#allocation3], 32
    $region13: #{tpu_custom_call.1} parent=1 // pred_fallthru
      _
    // Predicated region
    $region14: #{tpu_custom_call.1} parent=1 // pred_check
      _
    $region15: #{tpu_custom_call.1} parent=1 // pred_check_branch
      %36 = sbr.rel (0) target = $region17
    $region16: #{tpu_custom_call.1} parent=1 // pred_region
      %37 = dma.done [#allocation6], 2048
    $region17: #{tpu_custom_call.1} parent=1 // pred_fallthru
      _
    %v39 = vld [vmem:[#allocation2] sm:$0x1]
    %v40 = vmax.f32 %v39, 0.0
    %v41 = vmin.f32 %v40, 1.0
    %v42 = vld [vmem:[#allocation2 + $0x1] sm:$0x1]
    %v43 = vmax.f32 %v42, 0.0
    %v44 = vmin.f32 %v43, 1.0
    %v45 = vlaneseq
    %v46 = vshrl.u32 %v45, 7
    %v47 = vadd.s32 %v46, 8
    %v48 = vadd.s32 %v46, 16
    %v49 = vadd.s32 %v46, 24
    %v50 = vcvt.s32.f32 %v46
    %v51 = vcvt.s32.f32 %v47
    %v52 = vcvt.s32.f32 %v48
    %v53 = vcvt.s32.f32 %v49
    %v54 = vmul.f32 %v41, 7.0
    %v55 = vmul.f32 %v44, 7.0
    %v56 = vlaneseq
    %v57 = vshrl.u32 %v56, 7
    %v58 = vsub.s32 0, %v57
    %v59 = vrot.slane %v54, %v58
    %v60 = vsub.f32 %v59, %v50
    %v61 = vsub.f32 %v59, %v51
    %v62 = vsub.f32 %v59, %v52
    %v63 = vsub.f32 %v59, %v53
    %v64 = vand.u32 2147483647, %v60
    %v65 = vand.u32 2147483647, %v61
    %v66 = vand.u32 2147483647, %v62
    %v67 = vand.u32 2147483647, %v63
    %v68 = vsub.f32 1.0, %v64
    %v69 = vsub.f32 1.0, %v65
    %v70 = vsub.f32 1.0, %v66
    %v71 = vsub.f32 1.0, %v67
    %v72 = vmax.f32 %v68, 0.0
    %v73 = vmax.f32 %v69, 0.0
    %v74 = vmax.f32 %v70, 0.0
    %v75 = vmax.f32 %v71, 0.0
    %v76 = vpack.c.bf16 %v73, %v72
    %v77 = vpack.c.bf16 %v75, %v74
    %v78 = vlaneseq
    %v79 = vshrl.u32 %v78, 7
    %v80 = vsub.s32 0, %v79
    %v81 = vrot.slane %v55, %v80
    %v82 = vsub.f32 %v81, %v50
    %v83 = vsub.f32 %v81, %v51
    %v84 = vsub.f32 %v81, %v52
    %v85 = vsub.f32 %v81, %v53
    %v86 = vand.u32 2147483647, %v82
    %v87 = vand.u32 2147483647, %v83
    %v88 = vand.u32 2147483647, %v84
    %v89 = vand.u32 2147483647, %v85
    %v90 = vsub.f32 1.0, %v86
    %v91 = vsub.f32 1.0, %v87
    %v92 = vsub.f32 1.0, %v88
    %v93 = vsub.f32 1.0, %v89
    %v94 = vmax.f32 %v90, 0.0
    %v95 = vmax.f32 %v91, 0.0
    %v96 = vmax.f32 %v92, 0.0
    %v97 = vmax.f32 %v93, 0.0
    %v98 = vld [vmem:[#allocation5] sm:$0xf]
    %v99 = vld [vmem:[#allocation5 + $0x4] sm:$0xf]
    %v100 = vld [vmem:[#allocation5 + $0x8] sm:$0xf]
    %v101 = vld [vmem:[#allocation5 + $0xc] sm:$0xf]
    %v102 = vld [vmem:[#allocation5 + $0x10] sm:$0xf]
    %v103 = vld [vmem:[#allocation5 + $0x14] sm:$0xf]
    %v104 = vld [vmem:[#allocation5 + $0x18] sm:$0xf]
    %v105 = vld [vmem:[#allocation5 + $0x1c] sm:$0xf]
    %v114 = vunpack.c.l.b16 %v98
    %v115 = vunpack.c.l.b16 %v99
    %v116 = vunpack.c.l.b16 %v100
    %v117 = vunpack.c.l.b16 %v101
    %v118 = vunpack.c.l.b16 %v102
    %v119 = vunpack.c.l.b16 %v103
    %v120 = vunpack.c.l.b16 %v104
    %v121 = vunpack.c.l.b16 %v105
    %v122 = vpack.c.b16 %v115, %v114
    %v123 = vpack.c.b16 %v117, %v116
    %v124 = vpack.c.b16 %v119, %v118
    %v125 = vpack.c.b16 %v121, %v120
    %vm126 = vcmask 261120
    %v128 = vsel %vm126, %v122, 0
    %v131 = vsel %vm126, %v123, 0
    %v134 = vsel %vm126, %v124, 0
    %v137 = vsel %vm126, %v125, 0
    %139 = vmatprep.subr.bf16.mxu0 0
    %140 = vmatpush1.bf16.msra.mxu0 %v76
    %141 = vmatprep.subr.bf16.mxu0 0
    %142 = vmatpush1.bf16.msra.mxu0 %v77
    %143 = vmatprep.subr.bf16.mxu0 0
    %144 = vmatpush1.bf16.msra.mxu0 0
    %145 = vmatprep.subr.bf16.mxu0 0
    %146 = vmatpush1.bf16.msra.mxu0 0
    %147 = vmatprep.subr.bf16.mxu0 0
    %148 = vmatpush1.bf16.msra.mxu0 0
    %149 = vmatprep.subr.bf16.mxu0 0
    %150 = vmatpush1.bf16.msra.mxu0 0
    %151 = vmatprep.subr.bf16.mxu0 0
    %152 = vmatpush1.bf16.msra.mxu0 0
    %153 = vmatprep.subr.bf16.mxu0 0
    %154 = vmatpush1.bf16.msra.mxu0 0
    %155 = vmatprep.subr.bf16.mxu0 0
    %156 = vmatpush1.bf16.msra.mxu0 0
    %157 = vmatprep.subr.bf16.mxu0 0
    %158 = vmatpush1.bf16.msra.mxu0 0
    %159 = vmatprep.subr.bf16.mxu0 0
    %160 = vmatpush1.bf16.msra.mxu0 0
    %161 = vmatprep.subr.bf16.mxu0 0
    %162 = vmatpush1.bf16.msra.mxu0 0
    %163 = vmatprep.subr.bf16.mxu0 0
    %164 = vmatpush1.bf16.msra.mxu0 0
    %165 = vmatprep.subr.bf16.mxu0 0
    %166 = vmatpush1.bf16.msra.mxu0 0
    %167 = vmatprep.subr.bf16.mxu0 0
    %168 = vmatpush1.bf16.msra.mxu0 0
    %169 = vmatprep.subr.bf16.mxu0 0
    %170 = vmatpush1.bf16.msra.mxu0 0
    %171 = vmatprep.mubr.bf16.mxu0 0
    %172 = vmatmul.mubr.bf16.gmra.mrb[0].mxu0 %v128
    %v173 = vpop.f32.mrb[0].mxu0
    %v174 = vadd.f32 0.0, %v173
    %v175 = vpop.f32.mrb[0].mxu0
    %v176 = vpop.f32.mrb[0].mxu0
    %v177 = vadd.f32 0.0, %v176
    %v178 = vpop.f32.mrb[0].mxu0
    %179 = vmatprep.mubr.bf16.mxu0 0
    %180 = vmatmul.mubr.bf16.gmra.mrb[0].mxu0 %v131
    %v181 = vpop.f32.mrb[0].mxu0
    %v182 = vadd.f32 0.0, %v181
    %v183 = vpop.f32.mrb[0].mxu0
    %v184 = vpop.f32.mrb[0].mxu0
    %v185 = vadd.f32 0.0, %v184
    %v186 = vpop.f32.mrb[0].mxu0
    %187 = vmatprep.mubr.bf16.mxu0 0
    %188 = vmatmul.mubr.bf16.gmra.mrb[0].mxu0 %v134
    %v189 = vpop.f32.mrb[0].mxu0
    %v190 = vadd.f32 0.0, %v189
    %v191 = vpop.f32.mrb[0].mxu0
    %v192 = vpop.f32.mrb[0].mxu0
    %v193 = vadd.f32 0.0, %v192
    %v194 = vpop.f32.mrb[0].mxu0
    %195 = vmatprep.mubr.bf16.mxu0 0
    %196 = vmatmul.mubr.bf16.gmra.mrb[0].mxu0 %v137
    %v197 = vpop.f32.mrb[0].mxu0
    %v198 = vadd.f32 0.0, %v197
    %v199 = vpop.f32.mrb[0].mxu0
    %v200 = vpop.f32.mrb[0].mxu0
    %v201 = vadd.f32 0.0, %v200
    %v202 = vpop.f32.mrb[0].mxu0
    %203 = vdwg.mxu0
    %v204 = vmul.f32 %v174, %v94
    %v205 = vmul.f32 %v177, %v95
    %v206 = vmul.f32 %v182, %v96
    %v207 = vmul.f32 %v185, %v97
    %v208 = vmul.f32 %v190, %v94
    %v209 = vmul.f32 %v193, %v95
    %v210 = vmul.f32 %v198, %v96
    %v211 = vmul.f32 %v201, %v97
    %v212 = vmul.f32 %v41, 11.0
    %v213 = vmul.f32 %v44, 11.0
    %v214 = vlaneseq
    %v215 = vshrl.u32 %v214, 7
    %v216 = vsub.s32 0, %v215
    %v217 = vrot.slane %v212, %v216
    %v218 = vsub.f32 %v217, %v50
    %v219 = vsub.f32 %v217, %v51
    %v220 = vsub.f32 %v217, %v52
    %v221 = vsub.f32 %v217, %v53
    %v222 = vand.u32 2147483647, %v218
    %v223 = vand.u32 2147483647, %v219
    %v224 = vand.u32 2147483647, %v220
    %v225 = vand.u32 2147483647, %v221
    %v226 = vsub.f32 1.0, %v222
    %v227 = vsub.f32 1.0, %v223
    %v228 = vsub.f32 1.0, %v224
    %v229 = vsub.f32 1.0, %v225
    %v230 = vmax.f32 %v226, 0.0
    %v231 = vmax.f32 %v227, 0.0
    %v232 = vmax.f32 %v228, 0.0
    %v233 = vmax.f32 %v229, 0.0
    %v234 = vpack.c.bf16 %v231, %v230
    %v235 = vpack.c.bf16 %v233, %v232
    %v236 = vlaneseq
    %v237 = vshrl.u32 %v236, 7
    %v238 = vsub.s32 0, %v237
    %v239 = vrot.slane %v213, %v238
    %v240 = vsub.f32 %v239, %v50
    %v241 = vsub.f32 %v239, %v51
    %v242 = vsub.f32 %v239, %v52
    %v243 = vsub.f32 %v239, %v53
    %v244 = vand.u32 2147483647, %v240
    %v245 = vand.u32 2147483647, %v241
    %v246 = vand.u32 2147483647, %v242
    %v247 = vand.u32 2147483647, %v243
    %v248 = vsub.f32 1.0, %v244
    %v249 = vsub.f32 1.0, %v245
    %v250 = vsub.f32 1.0, %v246
    %v251 = vsub.f32 1.0, %v247
    %v252 = vmax.f32 %v248, 0.0
    %v253 = vmax.f32 %v249, 0.0
    %v254 = vmax.f32 %v250, 0.0
    %v255 = vmax.f32 %v251, 0.0
    %v256 = vld [vmem:[#allocation5 + $0x20] sm:$0xf]
    %v257 = vld [vmem:[#allocation5 + $0x24] sm:$0xf]
    %v258 = vld [vmem:[#allocation5 + $0x28] sm:$0xf]
    %v259 = vld [vmem:[#allocation5 + $0x2c] sm:$0xf]
    %v260 = vld [vmem:[#allocation5 + $0x30] sm:$0xf]
    %v261 = vld [vmem:[#allocation5 + $0x34] sm:$0xf]
    %v262 = vld [vmem:[#allocation5 + $0x38] sm:$0xf]
    %v263 = vld [vmem:[#allocation5 + $0x3c] sm:$0xf]
    %v272 = vunpack.c.l.b16 %v256
    %v273 = vunpack.c.l.b16 %v257
    %v274 = vunpack.c.l.b16 %v258
    %v275 = vunpack.c.l.b16 %v259
    %v276 = vunpack.c.l.b16 %v260
    %v277 = vunpack.c.l.b16 %v261
    %v278 = vunpack.c.l.b16 %v262
    %v279 = vunpack.c.l.b16 %v263
    %v280 = vpack.c.b16 %v273, %v272
    %v281 = vpack.c.b16 %v275, %v274
    %v282 = vpack.c.b16 %v277, %v276
    %v283 = vpack.c.b16 %v279, %v278
    %v285 = vsel %vm126, %v280, 0
    %v288 = vsel %vm126, %v281, 0
    %v291 = vsel %vm126, %v282, 0
    %v294 = vsel %vm126, %v283, 0
    %296 = vmatprep.subr.bf16.mxu0 0
    %297 = vmatpush1.bf16.msra.mxu0 %v234
    %298 = vmatprep.subr.bf16.mxu0 0
    %299 = vmatpush1.bf16.msra.mxu0 %v235
    %300 = vmatprep.subr.bf16.mxu0 0
    %301 = vmatpush1.bf16.msra.mxu0 0
    %302 = vmatprep.subr.bf16.mxu0 0
    %303 = vmatpush1.bf16.msra.mxu0 0
    %304 = vmatprep.subr.bf16.mxu0 0
    %305 = vmatpush1.bf16.msra.mxu0 0
    %306 = vmatprep.subr.bf16.mxu0 0
    %307 = vmatpush1.bf16.msra.mxu0 0
    %308 = vmatprep.subr.bf16.mxu0 0
    %309 = vmatpush1.bf16.msra.mxu0 0
    %310 = vmatprep.subr.bf16.mxu0 0
    %311 = vmatpush1.bf16.msra.mxu0 0
    %312 = vmatprep.subr.bf16.mxu0 0
    %313 = vmatpush1.bf16.msra.mxu0 0
    %314 = vmatprep.subr.bf16.mxu0 0
    %315 = vmatpush1.bf16.msra.mxu0 0
    %316 = vmatprep.subr.bf16.mxu0 0
    %317 = vmatpush1.bf16.msra.mxu0 0
    %318 = vmatprep.subr.bf16.mxu0 0
    %319 = vmatpush1.bf16.msra.mxu0 0
    %320 = vmatprep.subr.bf16.mxu0 0
    %321 = vmatpush1.bf16.msra.mxu0 0
    %322 = vmatprep.subr.bf16.mxu0 0
    %323 = vmatpush1.bf16.msra.mxu0 0
    %324 = vmatprep.subr.bf16.mxu0 0
    %325 = vmatpush1.bf16.msra.mxu0 0
    %326 = vmatprep.subr.bf16.mxu0 0
    %327 = vmatpush1.bf16.msra.mxu0 0
    %328 = vmatprep.mubr.bf16.mxu0 0
    %329 = vmatmul.mubr.bf16.gmra.mrb[0].mxu0 %v285
    %v330 = vpop.f32.mrb[0].mxu0
    %v331 = vadd.f32 0.0, %v330
    %v332 = vpop.f32.mrb[0].mxu0
    %v333 = vpop.f32.mrb[0].mxu0
    %v334 = vadd.f32 0.0, %v333
    %v335 = vpop.f32.mrb[0].mxu0
    %336 = vmatprep.mubr.bf16.mxu0 0
    %337 = vmatmul.mubr.bf16.gmra.mrb[0].mxu0 %v288
    %v338 = vpop.f32.mrb[0].mxu0
    %v339 = vadd.f32 0.0, %v338
    %v340 = vpop.f32.mrb[0].mxu0
    %v341 = vpop.f32.mrb[0].mxu0
    %v342 = vadd.f32 0.0, %v341
    %v343 = vpop.f32.mrb[0].mxu0
    %344 = vmatprep.mubr.bf16.mxu0 0
    %345 = vmatmul.mubr.bf16.gmra.mrb[0].mxu0 %v291
    %v346 = vpop.f32.mrb[0].mxu0
    %v347 = vadd.f32 0.0, %v346
    %v348 = vpop.f32.mrb[0].mxu0
    %v349 = vpop.f32.mrb[0].mxu0
    %v350 = vadd.f32 0.0, %v349
    %v351 = vpop.f32.mrb[0].mxu0
    %352 = vmatprep.mubr.bf16.mxu0 0
    %353 = vmatmul.mubr.bf16.gmra.mrb[0].mxu0 %v294
    %v354 = vpop.f32.mrb[0].mxu0
    %v355 = vadd.f32 0.0, %v354
    %v356 = vpop.f32.mrb[0].mxu0
    %v357 = vpop.f32.mrb[0].mxu0
    %v358 = vadd.f32 0.0, %v357
    %v359 = vpop.f32.mrb[0].mxu0
    %360 = vdwg.mxu0
    %v361 = vmul.f32 %v331, %v252
    %v362 = vmul.f32 %v334, %v253
    %v363 = vmul.f32 %v339, %v254
    %v364 = vmul.f32 %v342, %v255
    %v365 = vmul.f32 %v347, %v252
    %v366 = vmul.f32 %v350, %v253
    %v367 = vmul.f32 %v355, %v254
    %v368 = vmul.f32 %v358, %v255
    %v369 = vmul.f32 %v41, 17.0
    %v370 = vmul.f32 %v44, 17.0
    %v371 = vlaneseq
    %v372 = vshrl.u32 %v371, 7
    %v373 = vsub.s32 0, %v372
    %v374 = vrot.slane %v369, %v373
    %v375 = vsub.f32 %v374, %v50
    %v376 = vsub.f32 %v374, %v51
    %v377 = vsub.f32 %v374, %v52
    %v378 = vsub.f32 %v374, %v53
    %v379 = vand.u32 2147483647, %v375
    %v380 = vand.u32 2147483647, %v376
    %v381 = vand.u32 2147483647, %v377
    %v382 = vand.u32 2147483647, %v378
    %v383 = vsub.f32 1.0, %v379
    %v384 = vsub.f32 1.0, %v380
    %v385 = vsub.f32 1.0, %v381
    %v386 = vsub.f32 1.0, %v382
    %v387 = vmax.f32 %v383, 0.0
    %v388 = vmax.f32 %v384, 0.0
    %v389 = vmax.f32 %v385, 0.0
    %v390 = vmax.f32 %v386, 0.0
    %v391 = vpack.c.bf16 %v388, %v387
    %v392 = vpack.c.bf16 %v390, %v389
    %v393 = vlaneseq
    %v394 = vshrl.u32 %v393, 7
    %v395 = vsub.s32 0, %v394
    %v396 = vrot.slane %v370, %v395
    %v397 = vsub.f32 %v396, %v50
    %v398 = vsub.f32 %v396, %v51
    %v399 = vsub.f32 %v396, %v52
    %v400 = vsub.f32 %v396, %v53
    %v401 = vand.u32 2147483647, %v397
    %v402 = vand.u32 2147483647, %v398
    %v403 = vand.u32 2147483647, %v399
    %v404 = vand.u32 2147483647, %v400
    %v405 = vsub.f32 1.0, %v401
    %v406 = vsub.f32 1.0, %v402
    %v407 = vsub.f32 1.0, %v403
    %v408 = vsub.f32 1.0, %v404
    %v409 = vmax.f32 %v405, 0.0
    %v410 = vmax.f32 %v406, 0.0
    %v411 = vmax.f32 %v407, 0.0
    %v412 = vmax.f32 %v408, 0.0
    %v413 = vld [vmem:[#allocation5 + $0x40] sm:$0xf]
    %v414 = vld [vmem:[#allocation5 + $0x44] sm:$0xf]
    %v415 = vld [vmem:[#allocation5 + $0x48] sm:$0xf]
    %v416 = vld [vmem:[#allocation5 + $0x4c] sm:$0xf]
    %v417 = vld [vmem:[#allocation5 + $0x50] sm:$0xf]
    %v418 = vld [vmem:[#allocation5 + $0x54] sm:$0xf]
    %v419 = vld [vmem:[#allocation5 + $0x58] sm:$0xf]
    %v420 = vld [vmem:[#allocation5 + $0x5c] sm:$0xf]
    %v429 = vunpack.c.l.b16 %v413
    %v430 = vunpack.c.l.b16 %v414
    %v431 = vunpack.c.l.b16 %v415
    %v432 = vunpack.c.l.b16 %v416
    %v433 = vunpack.c.l.b16 %v417
    %v434 = vunpack.c.l.b16 %v418
    %v435 = vunpack.c.l.b16 %v419
    %v436 = vunpack.c.l.b16 %v420
    %v437 = vpack.c.b16 %v430, %v429
    %v438 = vpack.c.b16 %v432, %v431
    %v439 = vpack.c.b16 %v434, %v433
    %v440 = vpack.c.b16 %v436, %v435
    %v442 = vsel %vm126, %v437, 0
    %v445 = vsel %vm126, %v438, 0
    %v448 = vsel %vm126, %v439, 0
    %v451 = vsel %vm126, %v440, 0
    %453 = vmatprep.subr.bf16.mxu0 0
    %454 = vmatpush1.bf16.msra.mxu0 %v391
    %455 = vmatprep.subr.bf16.mxu0 0
    %456 = vmatpush1.bf16.msra.mxu0 %v392
    %457 = vmatprep.subr.bf16.mxu0 0
    %458 = vmatpush1.bf16.msra.mxu0 0
    %459 = vmatprep.subr.bf16.mxu0 0
    %460 = vmatpush1.bf16.msra.mxu0 0
    %461 = vmatprep.subr.bf16.mxu0 0
    %462 = vmatpush1.bf16.msra.mxu0 0
    %463 = vmatprep.subr.bf16.mxu0 0
    %464 = vmatpush1.bf16.msra.mxu0 0
    %465 = vmatprep.subr.bf16.mxu0 0
    %466 = vmatpush1.bf16.msra.mxu0 0
    %467 = vmatprep.subr.bf16.mxu0 0
    %468 = vmatpush1.bf16.msra.mxu0 0
    %469 = vmatprep.subr.bf16.mxu0 0
    %470 = vmatpush1.bf16.msra.mxu0 0
    %471 = vmatprep.subr.bf16.mxu0 0
    %472 = vmatpush1.bf16.msra.mxu0 0
    %473 = vmatprep.subr.bf16.mxu0 0
    %474 = vmatpush1.bf16.msra.mxu0 0
    %475 = vmatprep.subr.bf16.mxu0 0
    %476 = vmatpush1.bf16.msra.mxu0 0
    %477 = vmatprep.subr.bf16.mxu0 0
    %478 = vmatpush1.bf16.msra.mxu0 0
    %479 = vmatprep.subr.bf16.mxu0 0
    %480 = vmatpush1.bf16.msra.mxu0 0
    %481 = vmatprep.subr.bf16.mxu0 0
    %482 = vmatpush1.bf16.msra.mxu0 0
    %483 = vmatprep.subr.bf16.mxu0 0
    %484 = vmatpush1.bf16.msra.mxu0 0
    %485 = vmatprep.mubr.bf16.mxu0 0
    %486 = vmatmul.mubr.bf16.gmra.mrb[0].mxu0 %v442
    %v487 = vpop.f32.mrb[0].mxu0
    %v488 = vadd.f32 0.0, %v487
    %v489 = vpop.f32.mrb[0].mxu0
    %v490 = vpop.f32.mrb[0].mxu0
    %v491 = vadd.f32 0.0, %v490
    %v492 = vpop.f32.mrb[0].mxu0
    %493 = vmatprep.mubr.bf16.mxu0 0
    %494 = vmatmul.mubr.bf16.gmra.mrb[0].mxu0 %v445
    %v495 = vpop.f32.mrb[0].mxu0
    %v496 = vadd.f32 0.0, %v495
    %v497 = vpop.f32.mrb[0].mxu0
    %v498 = vpop.f32.mrb[0].mxu0
    %v499 = vadd.f32 0.0, %v498
    %v500 = vpop.f32.mrb[0].mxu0
    %501 = vmatprep.mubr.bf16.mxu0 0
    %502 = vmatmul.mubr.bf16.gmra.mrb[0].mxu0 %v448
    %v503 = vpop.f32.mrb[0].mxu0
    %v504 = vadd.f32 0.0, %v503
    %v505 = vpop.f32.mrb[0].mxu0
    %v506 = vpop.f32.mrb[0].mxu0
    %v507 = vadd.f32 0.0, %v506
    %v508 = vpop.f32.mrb[0].mxu0
    %509 = vmatprep.mubr.bf16.mxu0 0
    %510 = vmatmul.mubr.bf16.gmra.mrb[0].mxu0 %v451
    %v511 = vpop.f32.mrb[0].mxu0
    %v512 = vadd.f32 0.0, %v511
    %v513 = vpop.f32.mrb[0].mxu0
    %v514 = vpop.f32.mrb[0].mxu0
    %v515 = vadd.f32 0.0, %v514
    %v516 = vpop.f32.mrb[0].mxu0
    %517 = vdwg.mxu0
    %v518 = vmul.f32 %v488, %v409
    %v519 = vmul.f32 %v491, %v410
    %v520 = vmul.f32 %v496, %v411
    %v521 = vmul.f32 %v499, %v412
    %v522 = vmul.f32 %v504, %v409
    %v523 = vmul.f32 %v507, %v410
    %v524 = vmul.f32 %v512, %v411
    %v525 = vmul.f32 %v515, %v412
    %v526 = vmul.f32 %v41, 26.0
    %v527 = vmul.f32 %v44, 26.0
    %v528 = vlaneseq
    %v529 = vshrl.u32 %v528, 7
    %v530 = vsub.s32 0, %v529
    %v531 = vrot.slane %v526, %v530
    %v532 = vsub.f32 %v531, %v50
    %v533 = vsub.f32 %v531, %v51
    %v534 = vsub.f32 %v531, %v52
    %v535 = vsub.f32 %v531, %v53
    %v536 = vand.u32 2147483647, %v532
    %v537 = vand.u32 2147483647, %v533
    %v538 = vand.u32 2147483647, %v534
    %v539 = vand.u32 2147483647, %v535
    %v540 = vsub.f32 1.0, %v536
    %v541 = vsub.f32 1.0, %v537
    %v542 = vsub.f32 1.0, %v538
    %v543 = vsub.f32 1.0, %v539
    %v544 = vmax.f32 %v540, 0.0
    %v545 = vmax.f32 %v541, 0.0
    %v546 = vmax.f32 %v542, 0.0
    %v547 = vmax.f32 %v543, 0.0
    %v548 = vpack.c.bf16 %v545, %v544
    %v549 = vpack.c.bf16 %v547, %v546
    %v550 = vlaneseq
    %v551 = vshrl.u32 %v550, 7
    %v552 = vsub.s32 0, %v551
    %v553 = vrot.slane %v527, %v552
    %v554 = vsub.f32 %v553, %v50
    %v555 = vsub.f32 %v553, %v51
    %v556 = vsub.f32 %v553, %v52
    %v557 = vsub.f32 %v553, %v53
    %v558 = vand.u32 2147483647, %v554
    %v559 = vand.u32 2147483647, %v555
    %v560 = vand.u32 2147483647, %v556
    %v561 = vand.u32 2147483647, %v557
    %v562 = vsub.f32 1.0, %v558
    %v563 = vsub.f32 1.0, %v559
    %v564 = vsub.f32 1.0, %v560
    %v565 = vsub.f32 1.0, %v561
    %v566 = vmax.f32 %v562, 0.0
    %v567 = vmax.f32 %v563, 0.0
    %v568 = vmax.f32 %v564, 0.0
    %v569 = vmax.f32 %v565, 0.0
    %v570 = vld [vmem:[#allocation5 + $0x60] sm:$0xf]
    %v571 = vld [vmem:[#allocation5 + $0x64] sm:$0xf]
    %v572 = vld [vmem:[#allocation5 + $0x68] sm:$0xf]
    %v573 = vld [vmem:[#allocation5 + $0x6c] sm:$0xf]
    %v574 = vld [vmem:[#allocation5 + $0x70] sm:$0xf]
    %v575 = vld [vmem:[#allocation5 + $0x74] sm:$0xf]
    %v576 = vld [vmem:[#allocation5 + $0x78] sm:$0xf]
    %v577 = vld [vmem:[#allocation5 + $0x7c] sm:$0xf]
    %v586 = vunpack.c.l.b16 %v570
    %v587 = vunpack.c.l.b16 %v571
    %v588 = vunpack.c.l.b16 %v572
    %v589 = vunpack.c.l.b16 %v573
    %v590 = vunpack.c.l.b16 %v574
    %v591 = vunpack.c.l.b16 %v575
    %v592 = vunpack.c.l.b16 %v576
    %v593 = vunpack.c.l.b16 %v577
    %v594 = vpack.c.b16 %v587, %v586
    %v595 = vpack.c.b16 %v589, %v588
    %v596 = vpack.c.b16 %v591, %v590
    %v597 = vpack.c.b16 %v593, %v592
    %v599 = vsel %vm126, %v594, 0
    %v602 = vsel %vm126, %v595, 0
    %v605 = vsel %vm126, %v596, 0
    %v608 = vsel %vm126, %v597, 0
    %610 = vmatprep.subr.bf16.mxu0 0
    %611 = vmatpush1.bf16.msra.mxu0 %v548
    %612 = vmatprep.subr.bf16.mxu0 0
    %613 = vmatpush1.bf16.msra.mxu0 %v549
    %614 = vmatprep.subr.bf16.mxu0 0
    %615 = vmatpush1.bf16.msra.mxu0 0
    %616 = vmatprep.subr.bf16.mxu0 0
    %617 = vmatpush1.bf16.msra.mxu0 0
    %618 = vmatprep.subr.bf16.mxu0 0
    %619 = vmatpush1.bf16.msra.mxu0 0
    %620 = vmatprep.subr.bf16.mxu0 0
    %621 = vmatpush1.bf16.msra.mxu0 0
    %622 = vmatprep.subr.bf16.mxu0 0
    %623 = vmatpush1.bf16.msra.mxu0 0
    %624 = vmatprep.subr.bf16.mxu0 0
    %625 = vmatpush1.bf16.msra.mxu0 0
    %626 = vmatprep.subr.bf16.mxu0 0
    %627 = vmatpush1.bf16.msra.mxu0 0
    %628 = vmatprep.subr.bf16.mxu0 0
    %629 = vmatpush1.bf16.msra.mxu0 0
    %630 = vmatprep.subr.bf16.mxu0 0
    %631 = vmatpush1.bf16.msra.mxu0 0
    %632 = vmatprep.subr.bf16.mxu0 0
    %633 = vmatpush1.bf16.msra.mxu0 0
    %634 = vmatprep.subr.bf16.mxu0 0
    %635 = vmatpush1.bf16.msra.mxu0 0
    %636 = vmatprep.subr.bf16.mxu0 0
    %637 = vmatpush1.bf16.msra.mxu0 0
    %638 = vmatprep.subr.bf16.mxu0 0
    %639 = vmatpush1.bf16.msra.mxu0 0
    %640 = vmatprep.subr.bf16.mxu0 0
    %641 = vmatpush1.bf16.msra.mxu0 0
    %642 = vmatprep.mubr.bf16.mxu0 0
    %643 = vmatmul.mubr.bf16.gmra.mrb[0].mxu0 %v599
    %v644 = vpop.f32.mrb[0].mxu0
    %v645 = vadd.f32 0.0, %v644
    %v646 = vpop.f32.mrb[0].mxu0
    %v647 = vpop.f32.mrb[0].mxu0
    %v648 = vadd.f32 0.0, %v647
    %v649 = vpop.f32.mrb[0].mxu0
    %650 = vmatprep.mubr.bf16.mxu0 0
    %651 = vmatmul.mubr.bf16.gmra.mrb[0].mxu0 %v602
    %v652 = vpop.f32.mrb[0].mxu0
    %v653 = vadd.f32 0.0, %v652
    %v654 = vpop.f32.mrb[0].mxu0
    %v655 = vpop.f32.mrb[0].mxu0
    %v656 = vadd.f32 0.0, %v655
    %v657 = vpop.f32.mrb[0].mxu0
    %658 = vmatprep.mubr.bf16.mxu0 0
    %659 = vmatmul.mubr.bf16.gmra.mrb[0].mxu0 %v605
    %v660 = vpop.f32.mrb[0].mxu0
    %v661 = vadd.f32 0.0, %v660
    %v662 = vpop.f32.mrb[0].mxu0
    %v663 = vpop.f32.mrb[0].mxu0
    %v664 = vadd.f32 0.0, %v663
    %v665 = vpop.f32.mrb[0].mxu0
    %666 = vmatprep.mubr.bf16.mxu0 0
    %667 = vmatmul.mubr.bf16.gmra.mrb[0].mxu0 %v608
    %v668 = vpop.f32.mrb[0].mxu0
    %v669 = vadd.f32 0.0, %v668
    %v670 = vpop.f32.mrb[0].mxu0
    %v671 = vpop.f32.mrb[0].mxu0
    %v672 = vadd.f32 0.0, %v671
    %v673 = vpop.f32.mrb[0].mxu0
    %674 = vdwg.mxu0
    %v675 = vmul.f32 %v645, %v566
    %v676 = vmul.f32 %v648, %v567
    %v677 = vmul.f32 %v653, %v568
    %v678 = vmul.f32 %v656, %v569
    %v679 = vmul.f32 %v661, %v566
    %v680 = vmul.f32 %v664, %v567
    %v681 = vmul.f32 %v669, %v568
    %v682 = vmul.f32 %v672, %v569
    %v683 = vadd.f32 %v204, %v205
    %v684 = vadd.f32 %v683, %v206
    %v685 = vadd.f32 %v684, %v207
    %v686 = vrot.slane %v685, 4
    %v687 = vadd.f32 %v685, %v686
    %v688 = vrot.slane %v687, 2
    %v689 = vadd.f32 %v687, %v688
    %v690 = vrot.slane %v689, 1
    %v691 = vadd.f32 %v689, %v690
    %v692 = vadd.f32 %v208, %v209
    %v693 = vadd.f32 %v692, %v210
    %v694 = vadd.f32 %v693, %v211
    %v695 = vrot.slane %v694, 4
    %v696 = vadd.f32 %v694, %v695
    %v697 = vrot.slane %v696, 2
    %v698 = vadd.f32 %v696, %v697
    %v699 = vrot.slane %v698, 1
    %v700 = vadd.f32 %v698, %v699
    %v701 = vadd.f32 %v361, %v362
    %v702 = vadd.f32 %v701, %v363
    %v703 = vadd.f32 %v702, %v364
    %v704 = vrot.slane %v703, 4
    %v705 = vadd.f32 %v703, %v704
    %v706 = vrot.slane %v705, 2
    %v707 = vadd.f32 %v705, %v706
    %v708 = vrot.slane %v707, 1
    %v709 = vadd.f32 %v707, %v708
    %v710 = vadd.f32 %v365, %v366
    %v711 = vadd.f32 %v710, %v367
    %v712 = vadd.f32 %v711, %v368
    %v713 = vrot.slane %v712, 4
    %v714 = vadd.f32 %v712, %v713
    %v715 = vrot.slane %v714, 2
    %v716 = vadd.f32 %v714, %v715
    %v717 = vrot.slane %v716, 1
    %v718 = vadd.f32 %v716, %v717
    %v719 = vadd.f32 %v518, %v519
    %v720 = vadd.f32 %v719, %v520
    %v721 = vadd.f32 %v720, %v521
    %v722 = vrot.slane %v721, 4
    %v723 = vadd.f32 %v721, %v722
    %v724 = vrot.slane %v723, 2
    %v725 = vadd.f32 %v723, %v724
    %v726 = vrot.slane %v725, 1
    %v727 = vadd.f32 %v725, %v726
    %v728 = vadd.f32 %v522, %v523
    %v729 = vadd.f32 %v728, %v524
    %v730 = vadd.f32 %v729, %v525
    %v731 = vrot.slane %v730, 4
    %v732 = vadd.f32 %v730, %v731
    %v733 = vrot.slane %v732, 2
    %v734 = vadd.f32 %v732, %v733
    %v735 = vrot.slane %v734, 1
    %v736 = vadd.f32 %v734, %v735
    %v737 = vadd.f32 %v675, %v676
    %v738 = vadd.f32 %v737, %v677
    %v739 = vadd.f32 %v738, %v678
    %v740 = vrot.slane %v739, 4
    %v741 = vadd.f32 %v739, %v740
    %v742 = vrot.slane %v741, 2
    %v743 = vadd.f32 %v741, %v742
    %v744 = vrot.slane %v743, 1
    %v745 = vadd.f32 %v743, %v744
    %v746 = vadd.f32 %v679, %v680
    %v747 = vadd.f32 %v746, %v681
    %v748 = vadd.f32 %v747, %v682
    %v749 = vrot.slane %v748, 4
    %v750 = vadd.f32 %v748, %v749
    %v751 = vrot.slane %v750, 2
    %v752 = vadd.f32 %v750, %v751
    %v753 = vrot.slane %v752, 1
    %v754 = vadd.f32 %v752, %v753
    %vm763 = vcmask 1041409
    %v764 = vsel %vm763, %v700, %v691
    %vm765 = vcmask 1042434
    %v766 = vsel %vm765, %v709, %v764
    %vm767 = vcmask 1043459
    %v768 = vsel %vm767, %v718, %v766
    %vm769 = vcmask 1044484
    %v770 = vsel %vm769, %v727, %v768
    %vm771 = vcmask 1045509
    %v772 = vsel %vm771, %v736, %v770
    %vm773 = vcmask 1046534
    %v774 = vsel %vm773, %v745, %v772
    %vm775 = vcmask 1047559
    %v776 = vsel %vm775, %v754, %v774
    %778 = vst [vmem:[#allocation7] sm:$0xff] %v776
    // Predicated region
    $region18: #{tpu_custom_call.1} parent=1 // pred_check
      _
    $region19: #{tpu_custom_call.1} parent=1 // pred_check_branch
      %780 = sbr.rel (0) target = $region21
    $region20: #{tpu_custom_call.1} parent=1 // pred_region
      %s782 = ssub.s32 128, 128
      %783 = vsyncadd [#allocation4], %s782
      %s785 = sshll.u32 [#allocation7], 4
      %s786 = int_to_ptr.vmem [resolvable:$true] %s785
      %788 = dma.vmem_to_hbm [thread:$0]  %s786, 128, %s2, [#allocation4]
    $region21: #{tpu_custom_call.1} parent=1 // pred_fallthru
      _
    // Predicated region
    $region22: #{tpu_custom_call.1} parent=1 // pred_check
      _
    $region23: #{tpu_custom_call.1} parent=1 // pred_check_branch
      %790 = sbr.rel (0) target = $region25
    $region24: #{tpu_custom_call.1} parent=1 // pred_region
      %791 = dma.done [#allocation4], 128
    $region25: #{tpu_custom_call.1} parent=1 // pred_fallthru
      _
    %792 = vsyncpa [#allocation3], 1
    %793 = vsyncpa [#allocation6], 1
    %794 = vsyncpa [#allocation4], 1

</llo_original>
